<compile_context>
chip_gen: v5e
topology: v5e:2x2
jax: 0.10.0
libtpu: 0.0.40
codegen_flags: <defaults>
</compile_context>

<pallas_src>
import jax
import jax.numpy as jnp
from jax.experimental import pallas as pl
from jax.experimental.pallas import tpu as pltpu


_BLOCK_VMEM_BUDGET = 24 * 1024 * 1024   # budget for double-buffered in+out blocks
_VMEM_LIMIT_BYTES = 48 * 1024 * 1024    # explicit scoped-VMEM limit (safe on v5e/v6e/v7x)
_TARGET_IN_DMA = 1 * 1024 * 1024        # aim for >= ~1 MiB activation DMA per grid step
_MAX_NB = 8                             # cap static unroll over images per block


def _round_down(v, m):
    return (v // m) * m


def _cdiv(a, b):
    return -(-a // b)


def _const_block_spec(shape, index_map):
    """BlockSpec for constant-index operands (weight / BN affine / selection).

    Requests single buffering (pl.Buffered(1)) so these resident operands are
    not double-buffered, reclaiming VMEM for larger activation tiles. Falls
    back to a plain BlockSpec if pipeline_mode is unavailable.
    """
    try:
        return pl.BlockSpec(shape, index_map, pipeline_mode=pl.Buffered(1))
    except Exception:  # older JAX without pipeline_mode / Buffered
        return pl.BlockSpec(shape, index_map)


# ---------------------------------------------------------------------------
# stride == 1 (dense) path: Y[b, Cout, M] = W[Cout, Cin] @ X[b, Cin, M]
# ---------------------------------------------------------------------------
def _make_conv_bn_kernel(nb):
    def kernel(x_ref, w_ref, scale_ref, shift_ref, o_ref):
        # x_ref: (nb, Cin, TM)   nb images x TM spatial positions
        # w_ref: (Cout, Cin)     bf16 conv weight (resident, single-buffered)
        # scale/shift: (Cout, 1) f32 folded BN affine
        # o_ref: (nb, Cout, TM)
        w = w_ref[...]
        scale = scale_ref[...]
        shift = shift_ref[...]
        x = x_ref[...]
        if x.dtype != jnp.bfloat16:
            # cast once for the whole block (bf16 feeds the MXU); the temp is
            # <= half the f32 input block, well inside the VMEM headroom.
            x = x.astype(jnp.bfloat16)
        for b in range(nb):  # static unroll, nb is small (<= _MAX_NB)
            acc = jnp.dot(w, x[b], preferred_element_type=jnp.float32)  # (Cout, TM)
            o_ref[b] = (acc * scale + shift).astype(o_ref.dtype)
    return kernel


def _conv1x1_bn_dense(x_nchw, w_bf16, scale, shift, out_dtype, tm, cparams):
    N, Cin, Hq, Wq = x_nchw.shape
    Cout = w_bf16.shape[0]
    Msp = Hq * Wq
    # NCHW is channel-major -> (N, Cin, H*W) is a free, contiguous reshape.
    x_mat = x_nchw.reshape(N, Cin, Msp)

    xbytes = jnp.dtype(x_nchw.dtype).itemsize
    obytes = jnp.dtype(out_dtype).itemsize

    # VMEM bytes per spatial position per image (double-buffered in + out).
    per_pos = 2 * Cin * xbytes + 2 * Cout * obytes
    budget_pos = max(128, _BLOCK_VMEM_BUDGET // per_pos)
    tm_target = max(128, min(tm, budget_pos))
    if Msp >= 128:
        tm_eff = max(128, min(_round_down(tm_target, 128), _round_down(Msp, 128)))
    else:
        tm_eff = Msp  # full-dim block is always legal

    # Batch blocking: pack several images per grid step when blocks are tiny.
    nb = 1
    if N > 1:
        in_blk = tm_eff * Cin * xbytes
        nb_budget = max(1, _BLOCK_VMEM_BUDGET // max(1, tm_eff * per_pos))
        nb_dma = _cdiv(_TARGET_IN_DMA, max(1, in_blk))
        nb = max(1, min(N, _MAX_NB, nb_budget, nb_dma))

    # Guarantee >= 2 grid steps when possible so both v7x TensorCores get work.
    if _cdiv(N, nb) * _cdiv(Msp, tm_eff) < 2:
        if Msp >= 256:
            tm_eff = max(128, _round_down(_cdiv(Msp, 2), 128))
        elif N >= 2:
            nb = _cdiv(N, 2)
    grid = (_cdiv(N, nb), _cdiv(Msp, tm_eff))

    out = pl.pallas_call(
        _make_conv_bn_kernel(nb),
        out_shape=jax.ShapeDtypeStruct((N, Cout, Msp), out_dtype),
        grid_spec=pltpu.PrefetchScalarGridSpec(
            num_scalar_prefetch=0,
            grid=grid,
            in_specs=[
                pl.BlockSpec((nb, Cin, tm_eff), lambda n, j: (n, 0, j)),
                _const_block_spec((Cout, Cin), lambda n, j: (0, 0)),
                _const_block_spec((Cout, 1), lambda n, j: (0, 0)),
                _const_block_spec((Cout, 1), lambda n, j: (0, 0)),
            ],
            out_specs=pl.BlockSpec((nb, Cout, tm_eff), lambda n, j: (n, 0, j)),
        ),
        compiler_params=cparams,
    )(x_mat, w_bf16, scale, shift)

    # (N, Cout, H*W) -> (N, Cout, H, W): contiguous reshape, no transpose.
    return out.reshape(N, Cout, Hq, Wq)


# ---------------------------------------------------------------------------
# stride > 1 path (H % stride == 0): subsampling done inside the kernel.
#   * rows:    BlockSpec on the free (N, Cin, Ho, s, W) view pins the stride
#              phase to 0, so only the needed rows are DMA'd (no HBM copy).
#   * columns: 0/1 selection matmul (W, Wo) on the MXU (exact for bf16 data).
# ---------------------------------------------------------------------------
def _make_strided_conv_bn_kernel(nb, th):
    def kernel(x_ref, w_ref, sel_ref, scale_ref, shift_ref, o_ref):
        # x_ref:   (nb, Cin, TH, 1, W)  wanted rows only (stride phase 0)
        # w_ref:   (Cout, Cin) bf16
        # sel_ref: (W, Wo) bf16 0/1 column-decimation matrix
        # scale/shift: (Cout, 1) f32
        # o_ref:   (nb, Cout, TH, Wo)
        w = w_ref[...]
        sel = sel_ref[...]
        scale = scale_ref[...]
        shift = shift_ref[...]
        x = x_ref[...]
        if x.dtype != jnp.bfloat16:
            x = x.astype(jnp.bfloat16)
        for b in range(nb):          # static unroll (nb * th kept small)
            for t in range(th):
                xr = x[b, :, t, 0, :]                                      # (Cin, W)
                xd = jnp.dot(xr, sel, preferred_element_type=jnp.float32)  # (Cin, Wo)
                xd = xd.astype(jnp.bfloat16)  # exact: 0/1 selection of bf16 values
                acc = jnp.dot(w, xd, preferred_element_type=jnp.float32)   # (Cout, Wo)
                o_ref[b, :, t, :] = (acc * scale + shift).astype(o_ref.dtype)
    return kernel


def _conv1x1_bn_strided(x_nchw, w_bf16, scale, shift, stride, out_dtype, cparams):
    N, Cin, H, W = x_nchw.shape
    Cout = w_bf16.shape[0]
    Ho = H // stride
    Wo = _cdiv(W, stride)

    xbytes = jnp.dtype(x_nchw.dtype).itemsize
    obytes = jnp.dtype(out_dtype).itemsize

    # Free view: (N, Cin, Ho, stride, W); block index 0 on the stride dim picks
    # exactly the rows the 1x1/stride conv needs (no materialized copy).
    x5 = x_nchw.reshape(N, Cin, Ho, stride, W)
    # Static 0/1 column-selection matrix (tiny, resident, single-buffered).
    sel = (jnp.arange(W)[:, None] == (jnp.arange(Wo)[None, :] * stride)
           ).astype(jnp.bfloat16)

    per_row = 2 * Cin * W * xbytes + 2 * Cout * Wo * obytes
    th = max(1, min(Ho, 8, _BLOCK_VMEM_BUDGET // max(1, per_row)))
    nb = 1  # batching matters mostly for the dense path; keep unroll small here
    # Guarantee >= 2 grid steps when possible (v7x has 2 TensorCores).
    if N * _cdiv(Ho, th) < 2 and Ho >= 2:
        th = _cdiv(Ho, 2)
    grid = (_cdiv(N, nb), _cdiv(Ho, th))

    out = pl.pallas_call(
        _make_strided_conv_bn_kernel(nb, th),
        out_shape=jax.ShapeDtypeStruct((N, Cout, Ho, Wo), out_dtype),
        grid_spec=pltpu.PrefetchScalarGridSpec(
            num_scalar_prefetch=0,
            grid=grid,
            in_specs=[
                pl.BlockSpec((nb, Cin, th, 1, W), lambda n, r: (n, 0, r, 0, 0)),
                _const_block_spec((Cout, Cin), lambda n, r: (0, 0)),
                _const_block_spec((W, Wo), lambda n, r: (0, 0)),
                _const_block_spec((Cout, 1), lambda n, r: (0, 0)),
                _const_block_spec((Cout, 1), lambda n, r: (0, 0)),
            ],
            out_specs=pl.BlockSpec((nb, Cout, th, Wo), lambda n, r: (n, 0, r, 0)),
        ),
        compiler_params=cparams,
    )(x5, w_bf16, sel, scale, shift)
    return out


# ---------------------------------------------------------------------------
# Public wrapper: Conv1x1Linear forward (1x1 conv, bias=False, stride) + BN.
# ---------------------------------------------------------------------------
def conv1x1_linear_bn(x_nchw, weight, gamma, beta, running_mean, running_var,
                      *, stride=1, eps=1e-5, tm=2048, out_dtype=None):
    """x_nchw: (N, Cin, H, W); weight: (Cout, Cin) or (Cout, Cin, 1, 1).

    Pass bf16 x (and leave out_dtype=None) to halve HBM traffic if the model
    tolerates bf16 activations.
    """
    if weight.ndim == 4:
        weight = weight[:, :, 0, 0]
    N, Cin, H, W = x_nchw.shape
    Cout = weight.shape[0]
    out_dtype = x_nchw.dtype if out_dtype is None else out_dtype

    # Fold eval-mode BatchNorm into a per-output-channel affine (f32).
    scale = gamma.astype(jnp.float32) * jax.lax.rsqrt(
        running_var.astype(jnp.float32) + eps)
    shift = beta.astype(jnp.float32) - running_mean.astype(jnp.float32) * scale
    scale = scale.reshape(Cout, 1)
    shift = shift.reshape(Cout, 1)
    w_bf16 = weight.astype(jnp.bfloat16)

    cparams = pltpu.CompilerParams(
        dimension_semantics=("parallel", "parallel"),
        vmem_limit_bytes=_VMEM_LIMIT_BYTES)

    if stride > 1 and H % stride == 0:
        return _conv1x1_bn_strided(x_nchw, w_bf16, scale, shift, stride,
                                   out_dtype, cparams)
    if stride > 1:
        # TODO(synk): H not divisible by stride falls back to an XLA strided
        # slice (extra HBM pass) feeding the dense path; rare configuration.
        x_nchw = x_nchw[:, :, ::stride, ::stride]
    return _conv1x1_bn_dense(x_nchw, w_bf16, scale, shift, out_dtype, tm, cparams)


if __name__ == "__main__":
    key = jax.random.PRNGKey(0)
    k_x, k_w, k_g, k_b, k_m, k_v = jax.random.split(key, 6)

    N, Cin, H, W = 2, 4, 16, 16
    Cout = 8
    eps = 1e-5

    x = jax.random.normal(k_x, (N, Cin, H, W), dtype=jnp.float32)
    # nn.Conv2d(in, out, 1, bias=False) weight has shape (Cout, Cin, 1, 1)
    weight = jax.random.normal(k_w, (Cout, Cin), dtype=jnp.float32) * 0.1
    gamma = 1.0 + 0.1 * jax.random.normal(k_g, (Cout,), dtype=jnp.float32)
    beta = 0.1 * jax.random.normal(k_b, (Cout,), dtype=jnp.float32)
    running_mean = 0.05 * jax.random.normal(k_m, (Cout,), dtype=jnp.float32)
    running_var = jnp.abs(1.0 + 0.1 * jax.random.normal(k_v, (Cout,),
                                                        dtype=jnp.float32))

    # TODO(synk): training-mode BatchNorm (batch-stat computation + running-stat
    # momentum update) is not implemented; this kernel covers the eval path.

    scale_r = gamma * jax.lax.rsqrt(running_var + eps)
    shift_r = beta - running_mean * scale_r

    def ref_fn(x_in, s):
        xs = x_in.astype(jnp.float32)[:, :, ::s, ::s]
        conv = jnp.einsum("nchw,oc->nohw", xs, weight)
        return conv * scale_r[None, :, None, None] + shift_r[None, :, None, None]

    # 1) stride=1, f32 activations in / f32 out
    y1 = jax.block_until_ready(
        conv1x1_linear_bn(x, weight, gamma, beta, running_mean, running_var,
                          stride=1, eps=eps))
    ref1 = ref_fn(x, 1)
    assert y1.shape == (N, Cout, H, W)
    err1 = float(jnp.max(jnp.abs(y1 - ref1)))
    assert jnp.allclose(y1, ref1, atol=5e-2, rtol=5e-2), err1

    # 2) stride=1, bf16 activations in / bf16 out (halves HBM traffic)
    x_bf16 = x.astype(jnp.bfloat16)
    y2 = jax.block_until_ready(
        conv1x1_linear_bn(x_bf16, weight, gamma, beta, running_mean, running_var,
                          stride=1, eps=eps))
    ref2 = ref_fn(x_bf16, 1)
    assert y2.dtype == jnp.bfloat16
    err2 = float(jnp.max(jnp.abs(y2.astype(jnp.float32) - ref2)))
    assert jnp.allclose(y2.astype(jnp.float32), ref2, atol=5e-2, rtol=5e-2), err2

    # 3) stride=2 (in-kernel spatial subsampling), f32
    y3 = jax.block_until_ready(
        conv1x1_linear_bn(x, weight, gamma, beta, running_mean, running_var,
                          stride=2, eps=eps))
    ref3 = ref_fn(x, 2)
    assert y3.shape == (N, Cout, H // 2, W // 2)
    err3 = float(jnp.max(jnp.abs(y3 - ref3)))
    assert jnp.allclose(y3, ref3, atol=5e-2, rtol=5e-2), err3

    print("KERNEL_OK")
</pallas_src>

<mosaic_0001>
module attributes {stable_mosaic.version = 11 : i64} {
  func.func @kernel(%arg0: i32, %arg1: i32, %arg2: memref<2x4x128xf32, #tpu.memory_space<vmem>>, %arg3: memref<8x4xbf16, #tpu.memory_space<vmem>>, %arg4: memref<8x1xf32, #tpu.memory_space<vmem>>, %arg5: memref<8x1xf32, #tpu.memory_space<vmem>>, %arg6: memref<2x8x128xf32, #tpu.memory_space<vmem>>) attributes {dimension_semantics = [#tpu.dimension_semantics<parallel>, #tpu.dimension_semantics<parallel>], iteration_bounds = array<i64: 1, 2>, scalar_prefetch = 0 : i64, scratch_operands = 0 : i64, tpu.core_type = #tpu.core_type<tc>, window_params = [{transform_indices = @transform_0, window_bounds = array<i64: 2, 4, 128>}, {pipeline_mode = #tpu.pipeline_mode<synchronous>, transform_indices = @transform_1, window_bounds = array<i64: 8, 4>}, {pipeline_mode = #tpu.pipeline_mode<synchronous>, transform_indices = @transform_2, window_bounds = array<i64: 8, 1>}, {pipeline_mode = #tpu.pipeline_mode<synchronous>, transform_indices = @transform_3, window_bounds = array<i64: 8, 1>}, {transform_indices = @transform_4, window_bounds = array<i64: 2, 8, 128>}]} {
    %c0 = arith.constant 0 : index
    %c0_0 = arith.constant 0 : index
    %0 = vector.load %arg3[%c0, %c0_0] : memref<8x4xbf16, #tpu.memory_space<vmem>>, vector<8x4xbf16>
    %c0_1 = arith.constant 0 : index
    %c0_2 = arith.constant 0 : index
    %1 = vector.load %arg4[%c0_1, %c0_2] : memref<8x1xf32, #tpu.memory_space<vmem>>, vector<8x1xf32>
    %c0_3 = arith.constant 0 : index
    %c0_4 = arith.constant 0 : index
    %2 = vector.load %arg5[%c0_3, %c0_4] : memref<8x1xf32, #tpu.memory_space<vmem>>, vector<8x1xf32>
    %c0_5 = arith.constant 0 : index
    %c0_6 = arith.constant 0 : index
    %c0_7 = arith.constant 0 : index
    %3 = vector.load %arg2[%c0_5, %c0_6, %c0_7] : memref<2x4x128xf32, #tpu.memory_space<vmem>>, vector<2x4x128xf32>
    %4 = arith.truncf %3 : vector<2x4x128xf32> to vector<2x4x128xbf16>
    %5 = vector.extract_strided_slice %4 {offsets = [0, 0, 0], sizes = [1, 4, 128], strides = [1, 1, 1]} : vector<2x4x128xbf16> to vector<1x4x128xbf16>
    %6 = vector.shape_cast %5 : vector<1x4x128xbf16> to vector<4x128xbf16>
    %cst = arith.constant dense<0.000000e+00> : vector<8x128xf32>
    %7 = tpu.matmul %0, %6, %cst {dimension_numbers = #tpu.dot_dimension_numbers<[1], [0], [0], [1], [0, 0, 1, 1], [], []>} : vector<8x4xbf16>, vector<4x128xbf16>, vector<8x128xf32> -> vector<8x128xf32>
    %8 = vector.broadcast %1 : vector<8x1xf32> to vector<8x128xf32>
    %9 = arith.mulf %7, %8 : vector<8x128xf32>
    %10 = vector.broadcast %2 : vector<8x1xf32> to vector<8x128xf32>
    %11 = arith.addf %9, %10 : vector<8x128xf32>
    %c0_8 = arith.constant 0 : index
    %c0_9 = arith.constant 0 : index
    %c0_10 = arith.constant 0 : index
    %12 = vector.load %arg6[%c0_8, %c0_9, %c0_10] : memref<2x8x128xf32, #tpu.memory_space<vmem>>, vector<1x8x128xf32>
    %13 = vector.shape_cast %12 : vector<1x8x128xf32> to vector<8x128xf32>
    %14 = vector.shape_cast %11 : vector<8x128xf32> to vector<1x8x128xf32>
    tpu.vector_store %arg6[%c0_8, %c0_9, %c0_10], %14 {strides = array<i32>} : memref<2x8x128xf32, #tpu.memory_space<vmem>>, vector<1x8x128xf32>,
    %15 = vector.extract_strided_slice %4 {offsets = [1, 0, 0], sizes = [1, 4, 128], strides = [1, 1, 1]} : vector<2x4x128xbf16> to vector<1x4x128xbf16>
    %16 = vector.shape_cast %15 : vector<1x4x128xbf16> to vector<4x128xbf16>
    %cst_11 = arith.constant dense<0.000000e+00> : vector<8x128xf32>
    %17 = tpu.matmul %0, %16, %cst_11 {dimension_numbers = #tpu.dot_dimension_numbers<[1], [0], [0], [1], [0, 0, 1, 1], [], []>} : vector<8x4xbf16>, vector<4x128xbf16>, vector<8x128xf32> -> vector<8x128xf32>
    %18 = vector.broadcast %1 : vector<8x1xf32> to vector<8x128xf32>
    %19 = arith.mulf %17, %18 : vector<8x128xf32>
    %20 = vector.broadcast %2 : vector<8x1xf32> to vector<8x128xf32>
    %21 = arith.addf %19, %20 : vector<8x128xf32>
    %c1 = arith.constant 1 : index
    %c0_12 = arith.constant 0 : index
    %c0_13 = arith.constant 0 : index
    %22 = vector.load %arg6[%c1, %c0_12, %c0_13] : memref<2x8x128xf32, #tpu.memory_space<vmem>>, vector<1x8x128xf32>
    %23 = vector.shape_cast %22 : vector<1x8x128xf32> to vector<8x128xf32>
    %24 = vector.shape_cast %21 : vector<8x128xf32> to vector<1x8x128xf32>
    tpu.vector_store %arg6[%c1, %c0_12, %c0_13], %24 {strides = array<i32>} : memref<2x8x128xf32, #tpu.memory_space<vmem>>, vector<1x8x128xf32>,
    return
  }
  func.func @transform_0(%arg0: i32, %arg1: i32) -> (i32, i32, i32) {
    %c0_i32 = arith.constant 0 : i32
    %c0_i32_0 = arith.constant 0 : i32
    return %arg0, %c0_i32, %arg1 : i32, i32, i32
  }
  func.func @transform_1(%arg0: i32, %arg1: i32) -> (i32, i32) {
    %c0_i32 = arith.constant 0 : i32
    %c0_i32_0 = arith.constant 0 : i32
    %c0_i32_1 = arith.constant 0 : i32
    return %c0_i32, %c0_i32_0 : i32, i32
  }
  func.func @transform_2(%arg0: i32, %arg1: i32) -> (i32, i32) {
    %c0_i32 = arith.constant 0 : i32
    %c0_i32_0 = arith.constant 0 : i32
    %c0_i32_1 = arith.constant 0 : i32
    return %c0_i32, %c0_i32_0 : i32, i32
  }
  func.func @transform_3(%arg0: i32, %arg1: i32) -> (i32, i32) {
    %c0_i32 = arith.constant 0 : i32
    %c0_i32_0 = arith.constant 0 : i32
    %c0_i32_1 = arith.constant 0 : i32
    return %c0_i32, %c0_i32_0 : i32, i32
  }
  func.func @transform_4(%arg0: i32, %arg1: i32) -> (i32, i32, i32) {
    %c0_i32 = arith.constant 0 : i32
    %c0_i32_0 = arith.constant 0 : i32
    return %arg0, %c0_i32, %arg1 : i32, i32, i32
  }
}

</mosaic_0001>

<llo_original>
// kernel: tpu_custom_call.1
$region0: #{tpu_custom_call.1}
  #allocation0 [shape = 'u32[]', space=smem, size = 0x4, offset = 0x4, fixed_abs, tag = 'smem constant byte address 0x4 - core index']
  #allocation1 [shape = 'u32[72,128]{1,0:T(1,128)}', space=vmem, size = 0x9000, scoped, tag = 'internal scratch']
  %s0 = inlined_call_operand.vmem [shape: f32[2,4,256], index: 0, kind: input, shape index: {}]
  %s1 = inlined_call_operand.vmem [shape: bf16[8,4], index: 1, kind: input, shape index: {}]
  %s2 = inlined_call_operand.vmem [shape: f32[8,1], index: 2, kind: input, shape index: {}]
  %s3 = inlined_call_operand.vmem [shape: f32[8,1], index: 3, kind: input, shape index: {}]
  %s4 = inlined_call_operand.hbm [shape: f32[2,8,256], index: 4, kind: output, shape index: {}]
  %s5 = sld [smem:[#allocation0]]
  $region90: #{tpu_custom_call.1} parent=0
    _
  %s7 = ssub.s32 1, %s5
  %s8 = scalar_select 0, %s7, %s5
  $region1: #{tpu_custom_call.1} parent=0
    #allocation2 [shape = 'u8[8192]{0}', space=vmem, size = 0x2000, scoped, tag = 'input window, operand 0']
    #allocation3 [shape = 'u8[16384]{0}', space=vmem, size = 0x4000, scoped, tag = 'output window, operand 0']
    #allocation4 [shape = 's32[2]{0}', space=sflag, size = 0x8, scoped, tag = 'scoped memory for tpu_custom_call.1']
    %9 = vsyncpa [#allocation4], 0
    %s10 = scalar_lea.sflag [#allocation4], 1
    %11 = vsyncpa %s10, 0
    loop: start=0, step=1, limit=4
    $region2: #{tpu_custom_call.1} parent=1 // loop_pre_header
      _
    $region3: #{tpu_custom_call.1} parent=1 // loop_header
      %s13 = sphi 0, %s17
      %p14 = scmp.ge.s32.totalorder %s13, 4
      %s20 = sphi 0, %s32
      %s21 = sphi 0, %s28
      %s22 = sphi 0, %s20
      %s23 = sphi 0, %s21
      %s24 = sphi 0, %s22
      %s25 = sphi 0, %s23
      %s37 = sphi 0, %s39
      %s40 = sphi 0, %s37
      %s41 = sphi 0, %s40
      %s57 = sphi 0, %s41
      %s61 = sphi 0, %s61
      %s63 = sphi 0, %s61
      %s64 = sphi 0, %s63
      %s78 = sphi 0, %s64
      %s82 = sphi 0, %s82
      %s84 = sphi 0, %s82
      %s85 = sphi 0, %s84
      %s99 = sphi 0, %s85
      %s103 = sphi 0, %s103
      %s105 = sphi 0, %s103
      %s106 = sphi 0, %s105
      %s120 = sphi 0, %s106
      %s128 = sphi 0, %s130
      %s131 = sphi 0, %s128
      %s132 = sphi 0, %s131
      %s148 = sphi 0, %s132
    $region4: #{tpu_custom_call.1} parent=1 // loop_header_branch
      %16 = sbr.rel (%p14) target = $region8
    $region5: #{tpu_custom_call.1} parent=1 // loop_body
      %s18 = ssub.s32 %s13, 1
      %s19 = ssub.s32 %s13, 2
      %s26 = sadd.s32 1, %s21
      %p27 = scmp.ge.s32.totalorder %s26, 2
      %s28 = scalar_select %p27, 0, %s26
      %s29 = sadd.s32 1, %s20
      %s30 = scalar_select %p27, %s29, %s20
      %p31 = scmp.ge.s32.totalorder %s30, 1
      %s32 = scalar_select %p31, 0, %s30
      %s33 = ssub.s32 %s20, %s32
      %s34 = ssub.s32 %s21, %s28
      %s35 = sor.u32 %s33, %s34
      %p36 = scmp.eq.s32.totalorder %s35, 0
      %s38 = sadd.s32 %s37, 1
      %s39 = scalar_select %p36, %s37, %s38
      %p42 = pneg %p36
      %p43 = scmp.eq.s32.totalorder %s13, 1
      %p44 = por %p42, %p43
      %p45 = scmp.ne.s32.totalorder %s37, %s40
      %p46 = scmp.eq.s32.totalorder %s13, 0
      %p47 = por %p45, %p46
      %p48 = scmp.ne.s32.totalorder %s37, %s40
      %p49 = scmp.eq.s32.totalorder %s18, 1
      %p50 = por %p48, %p49
      %p51 = scmp.ne.s32.totalorder %s40, %s41
      %p52 = scmp.eq.s32.totalorder %s18, 0
      %p53 = por %p51, %p52
      %p54 = scmp.ne.s32.totalorder %s40, %s41
      %p55 = scmp.eq.s32.totalorder %s19, 1
      %p56 = por %p54, %p55
      %p58 = scmp.ne.s32.totalorder %s41, %s57
      %p59 = scmp.eq.s32.totalorder %s19, 0
      %p60 = por %p58, %p59
      %s62 = sadd.s32 %s61, 1
      %p65 = scmp.eq.s32.totalorder %s13, 1
      %p66 = scmp.ne.s32.totalorder %s61, %s63
      %p67 = scmp.eq.s32.totalorder %s13, 0
      %p68 = por %p66, %p67
      %p69 = scmp.ne.s32.totalorder %s61, %s63
      %p70 = scmp.eq.s32.totalorder %s18, 1
      %p71 = por %p69, %p70
      %p72 = scmp.ne.s32.totalorder %s63, %s64
      %p73 = scmp.eq.s32.totalorder %s18, 0
      %p74 = por %p72, %p73
      %p75 = scmp.ne.s32.totalorder %s63, %s64
      %p76 = scmp.eq.s32.totalorder %s19, 1
      %p77 = por %p75, %p76
      %p79 = scmp.ne.s32.totalorder %s64, %s78
      %p80 = scmp.eq.s32.totalorder %s19, 0
      %p81 = por %p79, %p80
      %s83 = sadd.s32 %s82, 1
      %p86 = scmp.eq.s32.totalorder %s13, 1
      %p87 = scmp.ne.s32.totalorder %s82, %s84
      %p88 = scmp.eq.s32.totalorder %s13, 0
      %p89 = por %p87, %p88
      %p90 = scmp.ne.s32.totalorder %s82, %s84
      %p91 = scmp.eq.s32.totalorder %s18, 1
      %p92 = por %p90, %p91
      %p93 = scmp.ne.s32.totalorder %s84, %s85
      %p94 = scmp.eq.s32.totalorder %s18, 0
      %p95 = por %p93, %p94
      %p96 = scmp.ne.s32.totalorder %s84, %s85
      %p97 = scmp.eq.s32.totalorder %s19, 1
      %p98 = por %p96, %p97
      %p100 = scmp.ne.s32.totalorder %s85, %s99
      %p101 = scmp.eq.s32.totalorder %s19, 0
      %p102 = por %p100, %p101
      %s104 = sadd.s32 %s103, 1
      %p107 = scmp.eq.s32.totalorder %s13, 1
      %p108 = scmp.ne.s32.totalorder %s103, %s105
      %p109 = scmp.eq.s32.totalorder %s13, 0
      %p110 = por %p108, %p109
      %p111 = scmp.ne.s32.totalorder %s103, %s105
      %p112 = scmp.eq.s32.totalorder %s18, 1
      %p113 = por %p111, %p112
      %p114 = scmp.ne.s32.totalorder %s105, %s106
      %p115 = scmp.eq.s32.totalorder %s18, 0
      %p116 = por %p114, %p115
      %p117 = scmp.ne.s32.totalorder %s105, %s106
      %p118 = scmp.eq.s32.totalorder %s19, 1
      %p119 = por %p117, %p118
      %p121 = scmp.ne.s32.totalorder %s106, %s120
      %p122 = scmp.eq.s32.totalorder %s19, 0
      %p123 = por %p121, %p122
      %s124 = ssub.s32 %s20, %s32
      %s125 = ssub.s32 %s21, %s28
      %s126 = sor.u32 %s124, %s125
      %p127 = scmp.eq.s32.totalorder %s126, 0
      %s129 = sadd.s32 %s128, 1
      %s130 = scalar_select %p127, %s128, %s129
      %p133 = pneg %p127
      %p134 = scmp.eq.s32.totalorder %s13, 1
      %p135 = por %p133, %p134
      %p136 = scmp.ne.s32.totalorder %s128, %s131
      %p137 = scmp.eq.s32.totalorder %s13, 0
      %p138 = por %p136, %p137
      %p139 = scmp.ne.s32.totalorder %s128, %s131
      %p140 = scmp.eq.s32.totalorder %s18, 1
      %p141 = por %p139, %p140
      %p142 = scmp.ne.s32.totalorder %s131, %s132
      %p143 = scmp.eq.s32.totalorder %s18, 0
      %p144 = por %p142, %p143
      %p145 = scmp.ne.s32.totalorder %s131, %s132
      %p146 = scmp.eq.s32.totalorder %s19, 1
      %p147 = por %p145, %p146
      %p149 = scmp.ne.s32.totalorder %s132, %s148
      %p150 = scmp.eq.s32.totalorder %s19, 0
      %p151 = por %p149, %p150
      %p152 = scmp.le.s32.totalorder 1, %s13
      %p153 = scmp.lt.s32.totalorder %s13, 3
      %p154 = pnand %p152, %p153
      %p155 = pneg %p154
      // Predicated region
      $region9: #{tpu_custom_call.1} parent=5 // pred_check
        _
      $region10: #{tpu_custom_call.1} parent=5 // pred_check_branch
        %157 = sbr.rel (%p154) target = $region12
      $region11: #{tpu_custom_call.1} parent=5 // pred_region
        %s158 = ssub.s32 %s13, 1
        // Predicated region
        $region13: #{tpu_custom_call.1} parent=11 // pred_check
          %p159 = pneg %p74
        $region14: #{tpu_custom_call.1} parent=11 // pred_check_branch
          %161 = sbr.rel (%p159) target = $region16
        $region15: #{tpu_custom_call.1} parent=11 // pred_region
          _
        $region16: #{tpu_custom_call.1} parent=11 // pred_fallthru
          _
        // Predicated region
        $region17: #{tpu_custom_call.1} parent=11 // pred_check
          %p162 = pneg %p95
        $region18: #{tpu_custom_call.1} parent=11 // pred_check_branch
          %164 = sbr.rel (%p162) target = $region20
        $region19: #{tpu_custom_call.1} parent=11 // pred_region
          _
        $region20: #{tpu_custom_call.1} parent=11 // pred_fallthru
          _
        // Predicated region
        $region21: #{tpu_custom_call.1} parent=11 // pred_check
          %p165 = pneg %p116
        $region22: #{tpu_custom_call.1} parent=11 // pred_check_branch
          %167 = sbr.rel (%p165) target = $region24
        $region23: #{tpu_custom_call.1} parent=11 // pred_region
          _
        $region24: #{tpu_custom_call.1} parent=11 // pred_fallthru
          _
      $region12: #{tpu_custom_call.1} parent=5 // pred_fallthru
        _
      %p168 = scmp.lt.s32.totalorder %s13, 2
      // Predicated region
      $region25: #{tpu_custom_call.1} parent=5 // pred_check
        %p169 = pneg %p168
      $region26: #{tpu_custom_call.1} parent=5 // pred_check_branch
        %171 = sbr.rel (%p169) target = $region28
      $region27: #{tpu_custom_call.1} parent=5 // pred_region
        // Predicated region
        $region29: #{tpu_custom_call.1} parent=27 // pred_check
          %p172 = pneg %p47
        $region30: #{tpu_custom_call.1} parent=27 // pred_check_branch
          %174 = sbr.rel (%p172) target = $region32
        $region31: #{tpu_custom_call.1} parent=27 // pred_region
          %s175 = sand.u32 %s37, 1
          %s176 = sand.u32 %s37, 1
          %s177 = smul.addr %s176, 8
          %s178 = scalar_lea.vmem [#allocation2], %s177
          %s179 = smul.u32 2, %s20
          %s180 = smul.addr %s179, 2
          %s181 = sadd.s32 %s21, %s180
          %s182 = smul.addr %s181, 4
          %s183 = scalar_lea.vmem %s0, %s182
          // Predicated region
          $region33: #{tpu_custom_call.1} parent=31 // pred_check
            _
          $region34: #{tpu_custom_call.1} parent=31 // pred_check_branch
            %185 = sbr.rel (0) target = $region36
          $region35: #{tpu_custom_call.1} parent=31 // pred_region
            // Predicated region
            $region37: #{tpu_custom_call.1} parent=35 // pred_check
              _
            $region38: #{tpu_custom_call.1} parent=35 // pred_check_branch
              %187 = sbr.rel target = $region40
            $region39: #{tpu_custom_call.1} parent=35 // pred_region
              // Predicated region
              $region52: #{tpu_custom_call.1} parent=39 // pred_check
                _
              $region53: #{tpu_custom_call.1} parent=39 // pred_check_branch
                %205 = sbr.rel (0) target = $region55
              $region54: #{tpu_custom_call.1} parent=39 // pred_region
                loop: start=0, step=1, limit=1
                $region56: #{tpu_custom_call.1} parent=54 // loop_pre_header
                  _
                $region57: #{tpu_custom_call.1} parent=54 // loop_header
                  %s207 = sphi 0, %s211
                  %p208 = scmp.ge.s32.totalorder %s207, 1
                  %s212 = sphi %s183, %s183
                  %s213 = sphi %s178, %s178
                $region58: #{tpu_custom_call.1} parent=54 // loop_header_branch
                  %210 = sbr.rel (%p208) target = $region62
                $region59: #{tpu_custom_call.1} parent=54 // loop_body
                  _
                $region60: #{tpu_custom_call.1} parent=54 // loop_footer
                  %s211 = sadd.s32 1, %s207
                $region61: #{tpu_custom_call.1} parent=54 // loop_footer_branch
                  %206 = sbr.rel target = $region57
                $region62: #{tpu_custom_call.1} parent=54 // loop_exit
                  _
                %s215 = ssub.s32 16, 1
                loop: start=0, step=1, limit=1
                $region63: #{tpu_custom_call.1} parent=54 // loop_pre_header
                  _
                $region64: #{tpu_custom_call.1} parent=54 // loop_header
                  %s217 = sphi 0, %s221
                  %p218 = scmp.ge.s32.totalorder %s217, 1
                  %s222 = sphi %s183, %s183
                  %s223 = sphi %s178, %s178
                $region65: #{tpu_custom_call.1} parent=54 // loop_header_branch
                  %220 = sbr.rel (%p218) target = $region69
                $region66: #{tpu_custom_call.1} parent=54 // loop_body
                  %v224 = vld [vmem:[%s222] sm:%s215]
                  %225 = vst [vmem:[%s223] sm:%s215] %v224
                  %v226 = vld [vmem:[%s222 + $0x8] sm:%s215]
                  %227 = vst [vmem:[%s223 + $0x4] sm:%s215] %v226
                $region67: #{tpu_custom_call.1} parent=54 // loop_footer
                  %s221 = sadd.s32 1, %s217
                $region68: #{tpu_custom_call.1} parent=54 // loop_footer_branch
                  %216 = sbr.rel target = $region64
                $region69: #{tpu_custom_call.1} parent=54 // loop_exit
                  _
              $region55: #{tpu_custom_call.1} parent=39 // pred_fallthru
                _
            $region40: #{tpu_custom_call.1} parent=35 // pred_fallthru
              _
            // Predicated region
            $region41: #{tpu_custom_call.1} parent=35 // pred_check
              _
            $region42: #{tpu_custom_call.1} parent=35 // pred_check_branch
              %189 = sbr.rel (0) target = $region44
            $region43: #{tpu_custom_call.1} parent=35 // pred_region
              %s191 = ssub.s32 16, 1
              loop: start=0, step=1, limit=1
              $region45: #{tpu_custom_call.1} parent=43 // loop_pre_header
                _
              $region46: #{tpu_custom_call.1} parent=43 // loop_header
                %s193 = sphi 0, %s197
                %p194 = scmp.ge.s32.totalorder %s193, 1
                %s198 = sphi %s183, %s183
                %s199 = sphi %s178, %s178
              $region47: #{tpu_custom_call.1} parent=43 // loop_header_branch
                %196 = sbr.rel (%p194) target = $region51
              $region48: #{tpu_custom_call.1} parent=43 // loop_body
                %v200 = vld [vmem:[%s198] sm:%s191]
                %201 = vst [vmem:[%s199] sm:%s191] %v200
                %v202 = vld [vmem:[%s198 + $0x8] sm:%s191]
                %203 = vst [vmem:[%s199 + $0x4] sm:%s191] %v202
              $region49: #{tpu_custom_call.1} parent=43 // loop_footer
                %s197 = sadd.s32 1, %s193
              $region50: #{tpu_custom_call.1} parent=43 // loop_footer_branch
                %192 = sbr.rel target = $region46
              $region51: #{tpu_custom_call.1} parent=43 // loop_exit
                _
            $region44: #{tpu_custom_call.1} parent=35 // pred_fallthru
              _
          $region36: #{tpu_custom_call.1} parent=31 // pred_fallthru
            _
          %228 = vnop
        $region32: #{tpu_custom_call.1} parent=27 // pred_fallthru
          _
      $region28: #{tpu_custom_call.1} parent=5 // pred_fallthru
        _
      %p229 = scmp.le.s32.totalorder 1, %s13
      %p230 = scmp.lt.s32.totalorder %s13, 3
      %p231 = pnand %p229, %p230
      %p232 = pneg %p231
      // Predicated region
      $region70: #{tpu_custom_call.1} parent=5 // pred_check
        _
      $region71: #{tpu_custom_call.1} parent=5 // pred_check_branch
        %234 = sbr.rel (%p231) target = $region73
      $region72: #{tpu_custom_call.1} parent=5 // pred_region
        %s235 = ssub.s32 %s13, 1
        %s236 = sand.u32 %s40, 1
        %s237 = sand.u32 %s40, 1
        %s238 = smul.addr %s237, 8
        %s239 = scalar_lea.vmem [#allocation2], %s238
        // Predicated region
        $region74: #{tpu_custom_call.1} parent=72 // pred_check
          %p240 = pneg %p53
        $region75: #{tpu_custom_call.1} parent=72 // pred_check_branch
          %242 = sbr.rel (%p240) target = $region77
        $region76: #{tpu_custom_call.1} parent=72 // pred_region
          _
        $region77: #{tpu_custom_call.1} parent=72 // pred_fallthru
          _
        %s243 = sand.u32 %s40, 1
        %s244 = sand.u32 %s40, 1
        %s245 = smul.addr %s244, 8
        %s246 = scalar_lea.vmem [#allocation2], %s245
        %p247 = pneg %p53
        %p248 = pneg %p50
        %p249 = pneg %p74
        %p250 = pneg %p71
        %p251 = pneg %p95
        %p252 = pneg %p92
        %p253 = pneg %p116
        %p254 = pneg %p113
        %p255 = pneg %p144
        %p256 = pneg %p141
        %s257 = sand.u32 %s131, 1
        %s258 = scalar_lea.sflag [#allocation4], %s257
        %s259 = sand.u32 %s131, 1
        %s260 = smul.addr %s259, 16
        %s261 = scalar_lea.vmem [#allocation3], %s260
        %s262 = smul.u32 2, %s22
        %s263 = smul.u32 2, %s22
        %v265 = vld [vmem:[%s1] sm:$0xf]
        %v266 = vld [vmem:[%s2] sm:$0xff]
        %v267 = vld [vmem:[%s3] sm:$0xff]
        %v268 = vld [vmem:[%s239] sm:$0xf]
        %v269 = vld [vmem:[%s239 + $0x4] sm:$0xf]
        %v270 = vpack.c.bf16 %v268, %v268
        %v271 = vpack.c.bf16 %v269, %v269
        %vm272 = vcmask 31744
        %v274 = vsel %vm272, %v265, 0
        %vm276 = vcmask 1041408
        %v278 = vsel %vm276, %v270, 0
        %280 = vmatpush.bf16.msra.mxu0 0
        %281 = vmatpush.bf16.msra.mxu0 0
        %282 = vmatpush.bf16.msra.mxu0 0
        %283 = vmatpush.bf16.msra.mxu0 0
        %284 = vmatpush.bf16.msra.mxu0 0
        %285 = vmatpush.bf16.msra.mxu0 0
        %286 = vmatpush.bf16.msra.mxu0 0
        %287 = vmatpush.bf16.msra.mxu0 %v278
        %288 = vmatmul.bf16.gmra.mxu0 %v274
        %v289 = vpop.f32.mrf.mxu0
        %v290 = vadd.f32 0.0, %v289
        %v291 = vpop.f32.mrf.mxu0
        %292 = vdwg.mxu0
        %294 = vset.pattern.permute.xlu0 0
        %295 = vperm.xlu0 %294, %v266
        %v296 = vpop.permute.xlu0 %295
        %v298 = vmul.f32 %v290, %v296
        %300 = vset.pattern.permute.xlu0 0
        %301 = vperm.xlu0 %300, %v267
        %v302 = vpop.permute.xlu0 %301
        %v304 = vadd.f32 %v298, %v302
        %305 = vst [vmem:[%s261] sm:$0xff] %v304
        %v307 = vsel %vm276, %v271, 0
        %309 = vmatpush.bf16.msra.mxu0 0
        %310 = vmatpush.bf16.msra.mxu0 0
        %311 = vmatpush.bf16.msra.mxu0 0
        %312 = vmatpush.bf16.msra.mxu0 0
        %313 = vmatpush.bf16.msra.mxu0 0
        %314 = vmatpush.bf16.msra.mxu0 0
        %315 = vmatpush.bf16.msra.mxu0 0
        %316 = vmatpush.bf16.msra.mxu0 %v307
        %317 = vmatmul.bf16.gmra.mxu0 %v274
        %v318 = vpop.f32.mrf.mxu0
        %v319 = vadd.f32 0.0, %v318
        %v320 = vpop.f32.mrf.mxu0
        %321 = vdwg.mxu0
        %v322 = vmul.f32 %v319, %v296
        %v323 = vadd.f32 %v322, %v302
        %s324 = scalar_lea.vmem %s261, 8 [#allocation3]
        %325 = vst [vmem:[%s324] sm:$0xff] %v323
        %s326 = sand.u32 %s131, 1
        %s327 = scalar_lea.sflag [#allocation4], %s326
        %s328 = sand.u32 %s131, 1
        %s329 = smul.addr %s328, 16
        %s330 = scalar_lea.vmem [#allocation3], %s329
        // Predicated region
        $region78: #{tpu_custom_call.1} parent=72 // pred_check
          %p331 = pneg %p141
        $region79: #{tpu_custom_call.1} parent=72 // pred_check_branch
          %333 = sbr.rel (%p331) target = $region81
        $region80: #{tpu_custom_call.1} parent=72 // pred_region
          %s334 = smul.u32 2, %s22
          %336 = vsyncadd %s327, 0
          %s337 = smul.addr %s334, 2
          %s338 = sadd.s32 %s23, %s337
          %s339 = smul.addr %s338, 8
          %s340 = scalar_lea.hbm %s4, %s339
          %s341 = sshll.u32 %s330, 4
          %s342 = int_to_ptr.vmem [resolvable:$true] %s341
          %s343 = sshll.u32 %s340, 4
          %s344 = int_to_ptr.hbm [resolvable:$true] %s343
          %349 = dma.vmem_to_hbm [thread:$0]  %s342, 256, %s344, %s327, 128, 256, 8
        $region81: #{tpu_custom_call.1} parent=72 // pred_fallthru
          _
      $region73: #{tpu_custom_call.1} parent=5 // pred_fallthru
        _
      %p350 = scmp.le.s32.totalorder 2, %s13
      // Predicated region
      $region82: #{tpu_custom_call.1} parent=5 // pred_check
        %p351 = pneg %p350
      $region83: #{tpu_custom_call.1} parent=5 // pred_check_branch
        %353 = sbr.rel (%p351) target = $region85
      $region84: #{tpu_custom_call.1} parent=5 // pred_region
        %s354 = ssub.s32 %s13, 2
        // Predicated region
        $region86: #{tpu_custom_call.1} parent=84 // pred_check
          %p355 = pneg %p147
        $region87: #{tpu_custom_call.1} parent=84 // pred_check_branch
          %357 = sbr.rel (%p355) target = $region89
        $region88: #{tpu_custom_call.1} parent=84 // pred_region
          %s358 = sand.u32 %s132, 1
          %s359 = scalar_lea.sflag [#allocation4], %s358
          %s360 = sand.u32 %s132, 1
          %s361 = smul.addr %s360, 16
          %s362 = scalar_lea.vmem [#allocation3], %s361
          %364 = dma.done %s359, 256
        $region89: #{tpu_custom_call.1} parent=84 // pred_fallthru
          _
      $region85: #{tpu_custom_call.1} parent=5 // pred_fallthru
        _
    $region6: #{tpu_custom_call.1} parent=1 // loop_footer
      %s17 = sadd.s32 1, %s13
    $region7: #{tpu_custom_call.1} parent=1 // loop_footer_branch
      %12 = sbr.rel target = $region3
    $region8: #{tpu_custom_call.1} parent=1 // loop_exit
      _
    %365 = vsyncpa [#allocation4], 1
    %s366 = scalar_lea.sflag [#allocation4], 1
    %367 = vsyncpa %s366, 1

</llo_original>
